<compile_context>
chip_gen: v6e
topology: v6e:2x2x1
jax: 0.10.0
libtpu: 0.0.40
codegen_flags: <defaults>
</compile_context>

<pallas_src>
import functools

import jax
import jax.numpy as jnp
from jax.experimental import pallas as pl
from jax.experimental.pallas import tpu as pltpu


_TARGET_BLOCK_BYTES = 8 * 1024 * 1024    # ~8 MiB per tile
_VMEM_LIMIT_BYTES = 48 * 1024 * 1024     # 4 x tile (in+out, double-buffered) + slack;
                                         # < 64 MiB so it is safe on v7x as well.
_MIN_PALLAS_BYTES = 128 * 1024           # below this, fused jnp beats a kernel launch


def _make_swish_kernel(beta):
    # beta is a static Python float (nn.Module constructor arg); a traced beta
    # would need scalar prefetch. Distinct beta values retrace/recompile.
    beta = float(beta)

    def kernel(x_ref, o_ref):
        xf = x_ref[...].astype(jnp.float32)
        # sigmoid(b*x) = 0.5 * (1 + tanh(0.5*b*x)): single EUP op + FMA,
        # no exact-reciprocal VALU work, no exp-overflow intermediate.
        sig = 0.5 * jnp.tanh((0.5 * beta) * xf) + 0.5
        o_ref[...] = (xf * sig).astype(o_ref.dtype)

    return kernel


@functools.cache
def _num_tensorcores():
    """Best-effort TensorCore count per chip (2 on v7x, 1 on v5e/v6e)."""
    try:
        info = pltpu.get_tpu_info()
    except Exception:
        return 1
    for attr in ("num_cores", "num_tensorcores", "tensorcores_per_chip",
                 "cores_per_chip"):
        v = getattr(info, attr, None)
        if isinstance(v, int) and v > 0:
            return v
    return 1


def _choose_lanes(n):
    """Widest lane-dense last dim (multiple of 128) that divides n, else None."""
    for lanes in (2048, 1024, 512, 256, 128):
        if n % lanes == 0:
            return lanes
    return None


def _block_rows(rows, lanes, itemsize):
    """Row-block size targeting ~_TARGET_BLOCK_BYTES per tile."""
    lanes_padded = pl.cdiv(lanes, 128) * 128     # VMEM lane footprint
    br = max(1, _TARGET_BLOCK_BYTES // (lanes_padded * itemsize))
    if rows < 8:
        return rows                              # full-extent sublane dim is allowed
    br = max(8, (min(br, rows) // 8) * 8)
    # Keep >= 2 grid steps when rows allow: overlaps DMA with compute and gives
    # both v7x TensorCores work under CORE_PARALLEL.
    if br >= rows and rows >= 16:
        br = max(8, (rows // 2 // 8) * 8)
    return br


def _swish_2d(x2d, beta, semantics):
    rows, lanes = x2d.shape
    itemsize = jnp.dtype(x2d.dtype).itemsize
    br = _block_rows(rows, lanes, itemsize)
    grid = (pl.cdiv(rows, br),)                  # partial trailing block is masked

    return pl.pallas_call(
        _make_swish_kernel(beta),
        out_shape=jax.ShapeDtypeStruct((rows, lanes), x2d.dtype),
        grid=grid,
        in_specs=[pl.BlockSpec((br, lanes), lambda i: (i, 0))],
        out_specs=pl.BlockSpec((br, lanes), lambda i: (i, 0)),
        compiler_params=pltpu.CompilerParams(
            dimension_semantics=(semantics,),
            vmem_limit_bytes=_VMEM_LIMIT_BYTES,
        ),
    )(x2d)


def _run_swish_2d(x2d, beta):
    # Prefer CORE_PARALLEL when the chip has >1 TensorCore (v7x): up to ~2x HBM
    # bandwidth on this purely mem-bound op. Fall back to PARALLEL if rejected.
    candidates = [pltpu.PARALLEL]
    if _num_tensorcores() > 1:
        candidates.insert(0, pltpu.CORE_PARALLEL)
    last_err = None
    for sem in candidates:
        try:
            return _swish_2d(x2d, beta, sem)
        except Exception as e:                   # unsupported semantics -> retry
            last_err = e
    raise last_err


def swish(x, beta=1.0):
    """Swish / SiLU: x * sigmoid(beta * x). Preserves shape and dtype."""
    orig_shape = x.shape
    n = x.size
    if n == 0:
        return x
    itemsize = jnp.dtype(x.dtype).itemsize

    # Tiny inputs: pallas_call launch/compile overhead dominates; let XLA fuse.
    if n * itemsize < _MIN_PALLAS_BYTES:
        xf = x.astype(jnp.float32)
        return (xf * jax.nn.sigmoid(beta * xf)).astype(x.dtype)

    # Fast path (n % 128 == 0): flatten to a lane-dense (rows, lanes) slab,
    # lanes a wide multiple of 128 -> full-width vst, no pad, no slice.
    lanes = _choose_lanes(n)
    if lanes is not None:
        out2d = _run_swish_2d(x.reshape(n // lanes, lanes), beta)
        return out2d.reshape(orig_shape)

    # Ragged path: keep the full trailing dim as the lane dim. The (8,128) rule
    # is satisfied because the block spans the whole last dim; avoids the 2-3x
    # HBM traffic of a wrapper-side pad + slice.
    if x.ndim >= 2:
        rows, lanes = n // orig_shape[-1], orig_shape[-1]
    else:
        rows, lanes = 1, n
    lanes_padded = pl.cdiv(lanes, 128) * 128
    if min(rows, 8) * lanes_padded * itemsize <= _TARGET_BLOCK_BYTES:
        try:
            out2d = _run_swish_2d(x.reshape(rows, lanes), beta)
            return out2d.reshape(orig_shape)
        except Exception:
            pass  # fall through to the padded path

    # Last resort (huge ragged last dim): pad to a lane-dense slab and slice.
    # swish(0) == 0, so zero-padding is harmless.
    lanes = 1024
    rows = pl.cdiv(n, lanes)
    x_flat = jnp.pad(jnp.ravel(x), (0, rows * lanes - n))
    out2d = _run_swish_2d(x_flat.reshape(rows, lanes), beta)
    return out2d.reshape(-1)[:n].reshape(orig_shape)


def swish_ref(x, beta=1.0):
    xf = x.astype(jnp.float32)
    return (xf * jax.nn.sigmoid(beta * xf)).astype(x.dtype)


if __name__ == "__main__":
    key = jax.random.PRNGKey(0)
    k1, k2, k3, k4 = jax.random.split(key, 4)

    # Module-sized NCHW input (tiny -> fused jnp escape hatch).
    x_small = jax.random.normal(k1, (2, 4, 16, 16), dtype=jnp.float32)
    out_small = jax.block_until_ready(swish(x_small, beta=1.0))
    assert out_small.shape == x_small.shape and out_small.dtype == x_small.dtype
    assert jnp.allclose(out_small, swish_ref(x_small, 1.0), atol=2e-6, rtol=1e-5)

    # Non-default beta (module constructor arg).
    out_beta = jax.block_until_ready(swish(x_small, beta=1.7))
    assert jnp.allclose(out_beta, swish_ref(x_small, 1.7), atol=2e-6, rtol=1e-5)

    # Larger activation map: exercises the lane-dense Pallas fast path.
    x_big = jax.random.normal(k2, (2, 4, 128, 128), dtype=jnp.float32)
    out_big = jax.block_until_ready(swish(x_big, beta=1.0))
    assert out_big.shape == x_big.shape and out_big.dtype == x_big.dtype
    assert jnp.allclose(out_big, swish_ref(x_big, 1.0), atol=2e-6, rtol=1e-5)

    # bf16 I/O stays bf16 in HBM; compute widens to f32 in-register only.
    x_bf = x_big.astype(jnp.bfloat16)
    out_bf = jax.block_until_ready(swish(x_bf, beta=1.0))
    assert out_bf.dtype == jnp.bfloat16
    assert jnp.allclose(out_bf.astype(jnp.float32),
                        swish_ref(x_bf, 1.0).astype(jnp.float32),
                        atol=2e-2, rtol=2e-2)

    # Ragged last dim (not a multiple of 128): full-row-block Pallas path, no pad.
    x_rag = jax.random.normal(k3, (400, 300), dtype=jnp.float32)
    out_rag = jax.block_until_ready(swish(x_rag, beta=0.9))
    assert out_rag.shape == x_rag.shape
    assert jnp.allclose(out_rag, swish_ref(x_rag, 0.9), atol=2e-6, rtol=1e-5)

    # Ragged 1-D input (rows < 8 branch).
    x_1d = jax.random.normal(k4, (50000,), dtype=jnp.float32)
    out_1d = jax.block_until_ready(swish(x_1d))
    assert jnp.allclose(out_1d, swish_ref(x_1d), atol=2e-6, rtol=1e-5)

    print("KERNEL_OK")
</pallas_src>

<mosaic_0001>
module attributes {stable_mosaic.version = 11 : i64} {
  func.func @kernel(%arg0: i32, %arg1: memref<32x2048xf32, #tpu.memory_space<vmem>>, %arg2: memref<32x2048xf32, #tpu.memory_space<vmem>>) attributes {dimension_semantics = [#tpu.dimension_semantics<parallel>], iteration_bounds = array<i64: 2>, scalar_prefetch = 0 : i64, scratch_operands = 0 : i64, tpu.core_type = #tpu.core_type<tc>, window_params = [{transform_indices = @transform_0, window_bounds = array<i64: 32, 2048>}, {transform_indices = @transform_1, window_bounds = array<i64: 32, 2048>}]} {
    %c0 = arith.constant 0 : index
    %c0_0 = arith.constant 0 : index
    %0 = vector.load %arg1[%c0, %c0_0] : memref<32x2048xf32, #tpu.memory_space<vmem>>, vector<32x2048xf32>
    %cst = arith.constant 5.000000e-01 : f32
    %1 = vector.broadcast %cst : f32 to vector<32x2048xf32>
    %2 = arith.mulf %1, %0 : vector<32x2048xf32>
    %3 = math.tanh %2 : vector<32x2048xf32>
    %cst_1 = arith.constant 5.000000e-01 : f32
    %4 = vector.broadcast %cst_1 : f32 to vector<32x2048xf32>
    %5 = arith.mulf %4, %3 : vector<32x2048xf32>
    %cst_2 = arith.constant 5.000000e-01 : f32
    %6 = vector.broadcast %cst_2 : f32 to vector<32x2048xf32>
    %7 = arith.addf %5, %6 : vector<32x2048xf32>
    %8 = arith.mulf %0, %7 : vector<32x2048xf32>
    %c0_3 = arith.constant 0 : index
    %c0_4 = arith.constant 0 : index
    %9 = vector.load %arg2[%c0_3, %c0_4] : memref<32x2048xf32, #tpu.memory_space<vmem>>, vector<32x2048xf32>
    tpu.vector_store %arg2[%c0_3, %c0_4], %8 {strides = array<i32>} : memref<32x2048xf32, #tpu.memory_space<vmem>>, vector<32x2048xf32>,
    return
  }
  func.func @transform_0(%arg0: i32) -> (i32, i32) {
    %c0_i32 = arith.constant 0 : i32
    %c0_i32_0 = arith.constant 0 : i32
    return %arg0, %c0_i32 : i32, i32
  }
  func.func @transform_1(%arg0: i32) -> (i32, i32) {
    %c0_i32 = arith.constant 0 : i32
    %c0_i32_0 = arith.constant 0 : i32
    return %arg0, %c0_i32 : i32, i32
  }
}

</mosaic_0001>

<llo_original>
// kernel: tpu_custom_call.1
$region0: #{tpu_custom_call.1}
  #allocation0 [shape = 'u32[]', space=smem, size = 0x4, offset = 0x4, fixed_abs, tag = 'smem constant byte address 0x4 - core index']
  #allocation1 [shape = 'u32[144,128]{1,0:T(1,128)}', space=vmem, size = 0x12000, scoped, tag = 'internal scratch']
  %s0 = inlined_call_operand.hbm [shape: f32[64,2048], index: 0, kind: input, shape index: {}]
  %s1 = inlined_call_operand.hbm [shape: f32[64,2048], index: 1, kind: output, shape index: {}]
  %s2 = sld [smem:[#allocation0]]
  $region41: #{tpu_custom_call.1} parent=0
    _
  %s4 = ssub.s32 1, %s2
  %s5 = scalar_select 0, %s4, %s2
  $region1: #{tpu_custom_call.1} parent=0
    #allocation2 [shape = 'u8[524288]{0}', space=vmem, size = 0x80000, scoped, tag = 'input window, operand 0']
    #allocation3 [shape = 's32[2]{0}', space=sflag, size = 0x8, scoped, tag = 'scoped memory for tpu_custom_call.1']
    #allocation4 [shape = 's32[2]{0}', space=sflag, size = 0x8, scoped, tag = 'scoped memory for tpu_custom_call.1']
    #allocation5 [shape = 'u8[524288]{0}', space=vmem, size = 0x80000, scoped, tag = 'output window, operand 0']
    %6 = vsyncpa [#allocation3], 0
    %s7 = scalar_lea.sflag [#allocation3], 1
    %8 = vsyncpa %s7, 0
    %9 = vsyncpa [#allocation4], 0
    %s10 = scalar_lea.sflag [#allocation4], 1
    %11 = vsyncpa %s10, 0
    loop: start=0, step=1, limit=4
    $region2: #{tpu_custom_call.1} parent=1 // loop_pre_header
      _
    $region3: #{tpu_custom_call.1} parent=1 // loop_header
      %s13 = sphi 0, %s17
      %p14 = scmp.ge.s32.totalorder %s13, 4
      %s23 = sphi 0, %s25
      %s26 = sphi 0, %s23
      %s27 = sphi 0, %s26
      %s43 = sphi 0, %s27
      %s49 = sphi 0, %s51
      %s52 = sphi 0, %s49
      %s53 = sphi 0, %s52
      %s69 = sphi 0, %s53
    $region4: #{tpu_custom_call.1} parent=1 // loop_header_branch
      %16 = sbr.rel (%p14) target = $region8
    $region5: #{tpu_custom_call.1} parent=1 // loop_body
      %s18 = ssub.s32 %s13, 1
      %s19 = ssub.s32 %s13, 2
      %s20 = sadd.s32 %s13, 1
      %s21 = ssub.s32 %s13, %s20
      %p22 = scmp.eq.s32.totalorder %s21, 0
      %s24 = sadd.s32 %s23, 1
      %s25 = scalar_select %p22, %s23, %s24
      %p28 = pneg %p22
      %p29 = scmp.eq.s32.totalorder %s13, 1
      %p30 = por %p28, %p29
      %p31 = scmp.ne.s32.totalorder %s23, %s26
      %p32 = scmp.eq.s32.totalorder %s13, 0
      %p33 = por %p31, %p32
      %p34 = scmp.ne.s32.totalorder %s23, %s26
      %p35 = scmp.eq.s32.totalorder %s18, 1
      %p36 = por %p34, %p35
      %p37 = scmp.ne.s32.totalorder %s26, %s27
      %p38 = scmp.eq.s32.totalorder %s18, 0
      %p39 = por %p37, %p38
      %p40 = scmp.ne.s32.totalorder %s26, %s27
      %p41 = scmp.eq.s32.totalorder %s19, 1
      %p42 = por %p40, %p41
      %p44 = scmp.ne.s32.totalorder %s27, %s43
      %p45 = scmp.eq.s32.totalorder %s19, 0
      %p46 = por %p44, %p45
      %s47 = ssub.s32 %s13, %s20
      %p48 = scmp.eq.s32.totalorder %s47, 0
      %s50 = sadd.s32 %s49, 1
      %s51 = scalar_select %p48, %s49, %s50
      %p54 = pneg %p48
      %p55 = scmp.eq.s32.totalorder %s13, 1
      %p56 = por %p54, %p55
      %p57 = scmp.ne.s32.totalorder %s49, %s52
      %p58 = scmp.eq.s32.totalorder %s13, 0
      %p59 = por %p57, %p58
      %p60 = scmp.ne.s32.totalorder %s49, %s52
      %p61 = scmp.eq.s32.totalorder %s18, 1
      %p62 = por %p60, %p61
      %p63 = scmp.ne.s32.totalorder %s52, %s53
      %p64 = scmp.eq.s32.totalorder %s18, 0
      %p65 = por %p63, %p64
      %p66 = scmp.ne.s32.totalorder %s52, %s53
      %p67 = scmp.eq.s32.totalorder %s19, 1
      %p68 = por %p66, %p67
      %p70 = scmp.ne.s32.totalorder %s53, %s69
      %p71 = scmp.eq.s32.totalorder %s19, 0
      %p72 = por %p70, %p71
      %p73 = scmp.le.s32.totalorder 1, %s13
      %p74 = scmp.lt.s32.totalorder %s13, 3
      %p75 = pnand %p73, %p74
      %p76 = pneg %p75
      // Predicated region
      $region9: #{tpu_custom_call.1} parent=5 // pred_check
        _
      $region10: #{tpu_custom_call.1} parent=5 // pred_check_branch
        %78 = sbr.rel (%p75) target = $region12
      $region11: #{tpu_custom_call.1} parent=5 // pred_region
        %s79 = ssub.s32 %s13, 1
      $region12: #{tpu_custom_call.1} parent=5 // pred_fallthru
        _
      %p80 = scmp.lt.s32.totalorder %s13, 2
      // Predicated region
      $region13: #{tpu_custom_call.1} parent=5 // pred_check
        %p81 = pneg %p80
      $region14: #{tpu_custom_call.1} parent=5 // pred_check_branch
        %83 = sbr.rel (%p81) target = $region16
      $region15: #{tpu_custom_call.1} parent=5 // pred_region
        // Predicated region
        $region17: #{tpu_custom_call.1} parent=15 // pred_check
          %p84 = pneg %p33
        $region18: #{tpu_custom_call.1} parent=15 // pred_check_branch
          %86 = sbr.rel (%p84) target = $region20
        $region19: #{tpu_custom_call.1} parent=15 // pred_region
          %s87 = sand.u32 %s23, 1
          %s88 = scalar_lea.sflag [#allocation3], %s87
          %s89 = sand.u32 %s23, 1
          %s90 = smul.addr %s89, 512
          %s91 = scalar_lea.vmem [#allocation2], %s90
          %s92 = smul.u32 4, %s13
          %s94 = ssub.s32 8192, 8192
          %95 = vsyncadd %s88, %s94
          %s96 = smul.addr %s92, 16
          %s97 = smul.addr %s96, 128
          %s98 = scalar_lea.hbm %s0, %s97
          %s99 = sshll.u32 %s91, 4
          %s100 = int_to_ptr.vmem [resolvable:$true] %s99
          %105 = dma.hbm_to_vmem [thread:$0]  %s98, 8192, %s100, %s88, 2048, 2048, 128
        $region20: #{tpu_custom_call.1} parent=15 // pred_fallthru
          _
      $region16: #{tpu_custom_call.1} parent=5 // pred_fallthru
        _
      %p106 = scmp.le.s32.totalorder 1, %s13
      %p107 = scmp.lt.s32.totalorder %s13, 3
      %p108 = pnand %p106, %p107
      %p109 = pneg %p108
      // Predicated region
      $region21: #{tpu_custom_call.1} parent=5 // pred_check
        _
      $region22: #{tpu_custom_call.1} parent=5 // pred_check_branch
        %111 = sbr.rel (%p108) target = $region24
      $region23: #{tpu_custom_call.1} parent=5 // pred_region
        %s112 = ssub.s32 %s13, 1
        %s113 = sand.u32 %s26, 1
        %s114 = scalar_lea.sflag [#allocation3], %s113
        %s115 = sand.u32 %s26, 1
        %s116 = smul.addr %s115, 512
        %s117 = scalar_lea.vmem [#allocation2], %s116
        // Predicated region
        $region25: #{tpu_custom_call.1} parent=23 // pred_check
          %p118 = pneg %p39
        $region26: #{tpu_custom_call.1} parent=23 // pred_check_branch
          %120 = sbr.rel (%p118) target = $region28
        $region27: #{tpu_custom_call.1} parent=23 // pred_region
          %121 = dma.done %s114, 8192
        $region28: #{tpu_custom_call.1} parent=23 // pred_fallthru
          _
        %s122 = sand.u32 %s26, 1
        %s123 = scalar_lea.sflag [#allocation3], %s122
        %s124 = sand.u32 %s26, 1
        %s125 = smul.addr %s124, 512
        %s126 = scalar_lea.vmem [#allocation2], %s125
        %p127 = pneg %p39
        %p128 = pneg %p36
        %p129 = pneg %p65
        %p130 = pneg %p62
        %s131 = sand.u32 %s52, 1
        %s132 = scalar_lea.sflag [#allocation4], %s131
        %s133 = sand.u32 %s52, 1
        %s134 = smul.addr %s133, 512
        %s135 = scalar_lea.vmem [#allocation5], %s134
        %s136 = smul.u32 4, %s18
        %s137 = smul.u32 4, %s18
        %v138 = vld [vmem:[%s117] sm:$0xff]
        %v139 = vld [vmem:[%s117 + $0x8] sm:$0xff]
        %v140 = vld [vmem:[%s117 + $0x10] sm:$0xff]
        %v141 = vld [vmem:[%s117 + $0x18] sm:$0xff]
        %v142 = vld [vmem:[%s117 + $0x20] sm:$0xff]
        %v143 = vld [vmem:[%s117 + $0x28] sm:$0xff]
        %v144 = vld [vmem:[%s117 + $0x30] sm:$0xff]
        %v145 = vld [vmem:[%s117 + $0x38] sm:$0xff]
        %v146 = vld [vmem:[%s117 + $0x40] sm:$0xff]
        %v147 = vld [vmem:[%s117 + $0x48] sm:$0xff]
        %v148 = vld [vmem:[%s117 + $0x50] sm:$0xff]
        %v149 = vld [vmem:[%s117 + $0x58] sm:$0xff]
        %v150 = vld [vmem:[%s117 + $0x60] sm:$0xff]
        %v151 = vld [vmem:[%s117 + $0x68] sm:$0xff]
        %v152 = vld [vmem:[%s117 + $0x70] sm:$0xff]
        %v153 = vld [vmem:[%s117 + $0x78] sm:$0xff]
        %v154 = vld [vmem:[%s117 + $0x80] sm:$0xff]
        %v155 = vld [vmem:[%s117 + $0x88] sm:$0xff]
        %v156 = vld [vmem:[%s117 + $0x90] sm:$0xff]
        %v157 = vld [vmem:[%s117 + $0x98] sm:$0xff]
        %v158 = vld [vmem:[%s117 + $0xa0] sm:$0xff]
        %v159 = vld [vmem:[%s117 + $0xa8] sm:$0xff]
        %v160 = vld [vmem:[%s117 + $0xb0] sm:$0xff]
        %v161 = vld [vmem:[%s117 + $0xb8] sm:$0xff]
        %v162 = vld [vmem:[%s117 + $0xc0] sm:$0xff]
        %v163 = vld [vmem:[%s117 + $0xc8] sm:$0xff]
        %v164 = vld [vmem:[%s117 + $0xd0] sm:$0xff]
        %v165 = vld [vmem:[%s117 + $0xd8] sm:$0xff]
        %v166 = vld [vmem:[%s117 + $0xe0] sm:$0xff]
        %v167 = vld [vmem:[%s117 + $0xe8] sm:$0xff]
        %v168 = vld [vmem:[%s117 + $0xf0] sm:$0xff]
        %v169 = vld [vmem:[%s117 + $0xf8] sm:$0xff]
        %v170 = vld [vmem:[%s117 + $0x100] sm:$0xff]
        %v171 = vld [vmem:[%s117 + $0x108] sm:$0xff]
        %v172 = vld [vmem:[%s117 + $0x110] sm:$0xff]
        %v173 = vld [vmem:[%s117 + $0x118] sm:$0xff]
        %v174 = vld [vmem:[%s117 + $0x120] sm:$0xff]
        %v175 = vld [vmem:[%s117 + $0x128] sm:$0xff]
        %v176 = vld [vmem:[%s117 + $0x130] sm:$0xff]
        %v177 = vld [vmem:[%s117 + $0x138] sm:$0xff]
        %v178 = vld [vmem:[%s117 + $0x140] sm:$0xff]
        %v179 = vld [vmem:[%s117 + $0x148] sm:$0xff]
        %v180 = vld [vmem:[%s117 + $0x150] sm:$0xff]
        %v181 = vld [vmem:[%s117 + $0x158] sm:$0xff]
        %v182 = vld [vmem:[%s117 + $0x160] sm:$0xff]
        %v183 = vld [vmem:[%s117 + $0x168] sm:$0xff]
        %v184 = vld [vmem:[%s117 + $0x170] sm:$0xff]
        %v185 = vld [vmem:[%s117 + $0x178] sm:$0xff]
        %v186 = vld [vmem:[%s117 + $0x180] sm:$0xff]
        %v187 = vld [vmem:[%s117 + $0x188] sm:$0xff]
        %v188 = vld [vmem:[%s117 + $0x190] sm:$0xff]
        %v189 = vld [vmem:[%s117 + $0x198] sm:$0xff]
        %v190 = vld [vmem:[%s117 + $0x1a0] sm:$0xff]
        %v191 = vld [vmem:[%s117 + $0x1a8] sm:$0xff]
        %v192 = vld [vmem:[%s117 + $0x1b0] sm:$0xff]
        %v193 = vld [vmem:[%s117 + $0x1b8] sm:$0xff]
        %v194 = vld [vmem:[%s117 + $0x1c0] sm:$0xff]
        %v195 = vld [vmem:[%s117 + $0x1c8] sm:$0xff]
        %v196 = vld [vmem:[%s117 + $0x1d0] sm:$0xff]
        %v197 = vld [vmem:[%s117 + $0x1d8] sm:$0xff]
        %v198 = vld [vmem:[%s117 + $0x1e0] sm:$0xff]
        %v199 = vld [vmem:[%s117 + $0x1e8] sm:$0xff]
        %v200 = vld [vmem:[%s117 + $0x1f0] sm:$0xff]
        %v201 = vld [vmem:[%s117 + $0x1f8] sm:$0xff]
        %v202 = vmul.f32 %v138, 0.5
        %v203 = vmul.f32 %v139, 0.5
        %v204 = vmul.f32 %v140, 0.5
        %v205 = vmul.f32 %v141, 0.5
        %v206 = vmul.f32 %v142, 0.5
        %v207 = vmul.f32 %v143, 0.5
        %v208 = vmul.f32 %v144, 0.5
        %v209 = vmul.f32 %v145, 0.5
        %v210 = vmul.f32 %v146, 0.5
        %v211 = vmul.f32 %v147, 0.5
        %v212 = vmul.f32 %v148, 0.5
        %v213 = vmul.f32 %v149, 0.5
        %v214 = vmul.f32 %v150, 0.5
        %v215 = vmul.f32 %v151, 0.5
        %v216 = vmul.f32 %v152, 0.5
        %v217 = vmul.f32 %v153, 0.5
        %v218 = vmul.f32 %v154, 0.5
        %v219 = vmul.f32 %v155, 0.5
        %v220 = vmul.f32 %v156, 0.5
        %v221 = vmul.f32 %v157, 0.5
        %v222 = vmul.f32 %v158, 0.5
        %v223 = vmul.f32 %v159, 0.5
        %v224 = vmul.f32 %v160, 0.5
        %v225 = vmul.f32 %v161, 0.5
        %v226 = vmul.f32 %v162, 0.5
        %v227 = vmul.f32 %v163, 0.5
        %v228 = vmul.f32 %v164, 0.5
        %v229 = vmul.f32 %v165, 0.5
        %v230 = vmul.f32 %v166, 0.5
        %v231 = vmul.f32 %v167, 0.5
        %v232 = vmul.f32 %v168, 0.5
        %v233 = vmul.f32 %v169, 0.5
        %v234 = vmul.f32 %v170, 0.5
        %v235 = vmul.f32 %v171, 0.5
        %v236 = vmul.f32 %v172, 0.5
        %v237 = vmul.f32 %v173, 0.5
        %v238 = vmul.f32 %v174, 0.5
        %v239 = vmul.f32 %v175, 0.5
        %v240 = vmul.f32 %v176, 0.5
        %v241 = vmul.f32 %v177, 0.5
        %v242 = vmul.f32 %v178, 0.5
        %v243 = vmul.f32 %v179, 0.5
        %v244 = vmul.f32 %v180, 0.5
        %v245 = vmul.f32 %v181, 0.5
        %v246 = vmul.f32 %v182, 0.5
        %v247 = vmul.f32 %v183, 0.5
        %v248 = vmul.f32 %v184, 0.5
        %v249 = vmul.f32 %v185, 0.5
        %v250 = vmul.f32 %v186, 0.5
        %v251 = vmul.f32 %v187, 0.5
        %v252 = vmul.f32 %v188, 0.5
        %v253 = vmul.f32 %v189, 0.5
        %v254 = vmul.f32 %v190, 0.5
        %v255 = vmul.f32 %v191, 0.5
        %v256 = vmul.f32 %v192, 0.5
        %v257 = vmul.f32 %v193, 0.5
        %v258 = vmul.f32 %v194, 0.5
        %v259 = vmul.f32 %v195, 0.5
        %v260 = vmul.f32 %v196, 0.5
        %v261 = vmul.f32 %v197, 0.5
        %v262 = vmul.f32 %v198, 0.5
        %v263 = vmul.f32 %v199, 0.5
        %v264 = vmul.f32 %v200, 0.5
        %v265 = vmul.f32 %v201, 0.5
        %v266 = vtanh.pop %v202
        %v267 = vtanh.pop %v203
        %v268 = vtanh.pop %v204
        %v269 = vtanh.pop %v205
        %v270 = vtanh.pop %v206
        %v271 = vtanh.pop %v207
        %v272 = vtanh.pop %v208
        %v273 = vtanh.pop %v209
        %v274 = vtanh.pop %v210
        %v275 = vtanh.pop %v211
        %v276 = vtanh.pop %v212
        %v277 = vtanh.pop %v213
        %v278 = vtanh.pop %v214
        %v279 = vtanh.pop %v215
        %v280 = vtanh.pop %v216
        %v281 = vtanh.pop %v217
        %v282 = vtanh.pop %v218
        %v283 = vtanh.pop %v219
        %v284 = vtanh.pop %v220
        %v285 = vtanh.pop %v221
        %v286 = vtanh.pop %v222
        %v287 = vtanh.pop %v223
        %v288 = vtanh.pop %v224
        %v289 = vtanh.pop %v225
        %v290 = vtanh.pop %v226
        %v291 = vtanh.pop %v227
        %v292 = vtanh.pop %v228
        %v293 = vtanh.pop %v229
        %v294 = vtanh.pop %v230
        %v295 = vtanh.pop %v231
        %v296 = vtanh.pop %v232
        %v297 = vtanh.pop %v233
        %v298 = vtanh.pop %v234
        %v299 = vtanh.pop %v235
        %v300 = vtanh.pop %v236
        %v301 = vtanh.pop %v237
        %v302 = vtanh.pop %v238
        %v303 = vtanh.pop %v239
        %v304 = vtanh.pop %v240
        %v305 = vtanh.pop %v241
        %v306 = vtanh.pop %v242
        %v307 = vtanh.pop %v243
        %v308 = vtanh.pop %v244
        %v309 = vtanh.pop %v245
        %v310 = vtanh.pop %v246
        %v311 = vtanh.pop %v247
        %v312 = vtanh.pop %v248
        %v313 = vtanh.pop %v249
        %v314 = vtanh.pop %v250
        %v315 = vtanh.pop %v251
        %v316 = vtanh.pop %v252
        %v317 = vtanh.pop %v253
        %v318 = vtanh.pop %v254
        %v319 = vtanh.pop %v255
        %v320 = vtanh.pop %v256
        %v321 = vtanh.pop %v257
        %v322 = vtanh.pop %v258
        %v323 = vtanh.pop %v259
        %v324 = vtanh.pop %v260
        %v325 = vtanh.pop %v261
        %v326 = vtanh.pop %v262
        %v327 = vtanh.pop %v263
        %v328 = vtanh.pop %v264
        %v329 = vtanh.pop %v265
        %v330 = vmul.f32 %v266, 0.5
        %v331 = vmul.f32 %v267, 0.5
        %v332 = vmul.f32 %v268, 0.5
        %v333 = vmul.f32 %v269, 0.5
        %v334 = vmul.f32 %v270, 0.5
        %v335 = vmul.f32 %v271, 0.5
        %v336 = vmul.f32 %v272, 0.5
        %v337 = vmul.f32 %v273, 0.5
        %v338 = vmul.f32 %v274, 0.5
        %v339 = vmul.f32 %v275, 0.5
        %v340 = vmul.f32 %v276, 0.5
        %v341 = vmul.f32 %v277, 0.5
        %v342 = vmul.f32 %v278, 0.5
        %v343 = vmul.f32 %v279, 0.5
        %v344 = vmul.f32 %v280, 0.5
        %v345 = vmul.f32 %v281, 0.5
        %v346 = vmul.f32 %v282, 0.5
        %v347 = vmul.f32 %v283, 0.5
        %v348 = vmul.f32 %v284, 0.5
        %v349 = vmul.f32 %v285, 0.5
        %v350 = vmul.f32 %v286, 0.5
        %v351 = vmul.f32 %v287, 0.5
        %v352 = vmul.f32 %v288, 0.5
        %v353 = vmul.f32 %v289, 0.5
        %v354 = vmul.f32 %v290, 0.5
        %v355 = vmul.f32 %v291, 0.5
        %v356 = vmul.f32 %v292, 0.5
        %v357 = vmul.f32 %v293, 0.5
        %v358 = vmul.f32 %v294, 0.5
        %v359 = vmul.f32 %v295, 0.5
        %v360 = vmul.f32 %v296, 0.5
        %v361 = vmul.f32 %v297, 0.5
        %v362 = vmul.f32 %v298, 0.5
        %v363 = vmul.f32 %v299, 0.5
        %v364 = vmul.f32 %v300, 0.5
        %v365 = vmul.f32 %v301, 0.5
        %v366 = vmul.f32 %v302, 0.5
        %v367 = vmul.f32 %v303, 0.5
        %v368 = vmul.f32 %v304, 0.5
        %v369 = vmul.f32 %v305, 0.5
        %v370 = vmul.f32 %v306, 0.5
        %v371 = vmul.f32 %v307, 0.5
        %v372 = vmul.f32 %v308, 0.5
        %v373 = vmul.f32 %v309, 0.5
        %v374 = vmul.f32 %v310, 0.5
        %v375 = vmul.f32 %v311, 0.5
        %v376 = vmul.f32 %v312, 0.5
        %v377 = vmul.f32 %v313, 0.5
        %v378 = vmul.f32 %v314, 0.5
        %v379 = vmul.f32 %v315, 0.5
        %v380 = vmul.f32 %v316, 0.5
        %v381 = vmul.f32 %v317, 0.5
        %v382 = vmul.f32 %v318, 0.5
        %v383 = vmul.f32 %v319, 0.5
        %v384 = vmul.f32 %v320, 0.5
        %v385 = vmul.f32 %v321, 0.5
        %v386 = vmul.f32 %v322, 0.5
        %v387 = vmul.f32 %v323, 0.5
        %v388 = vmul.f32 %v324, 0.5
        %v389 = vmul.f32 %v325, 0.5
        %v390 = vmul.f32 %v326, 0.5
        %v391 = vmul.f32 %v327, 0.5
        %v392 = vmul.f32 %v328, 0.5
        %v393 = vmul.f32 %v329, 0.5
        %v394 = vadd.f32 %v330, 0.5
        %v395 = vadd.f32 %v331, 0.5
        %v396 = vadd.f32 %v332, 0.5
        %v397 = vadd.f32 %v333, 0.5
        %v398 = vadd.f32 %v334, 0.5
        %v399 = vadd.f32 %v335, 0.5
        %v400 = vadd.f32 %v336, 0.5
        %v401 = vadd.f32 %v337, 0.5
        %v402 = vadd.f32 %v338, 0.5
        %v403 = vadd.f32 %v339, 0.5
        %v404 = vadd.f32 %v340, 0.5
        %v405 = vadd.f32 %v341, 0.5
        %v406 = vadd.f32 %v342, 0.5
        %v407 = vadd.f32 %v343, 0.5
        %v408 = vadd.f32 %v344, 0.5
        %v409 = vadd.f32 %v345, 0.5
        %v410 = vadd.f32 %v346, 0.5
        %v411 = vadd.f32 %v347, 0.5
        %v412 = vadd.f32 %v348, 0.5
        %v413 = vadd.f32 %v349, 0.5
        %v414 = vadd.f32 %v350, 0.5
        %v415 = vadd.f32 %v351, 0.5
        %v416 = vadd.f32 %v352, 0.5
        %v417 = vadd.f32 %v353, 0.5
        %v418 = vadd.f32 %v354, 0.5
        %v419 = vadd.f32 %v355, 0.5
        %v420 = vadd.f32 %v356, 0.5
        %v421 = vadd.f32 %v357, 0.5
        %v422 = vadd.f32 %v358, 0.5
        %v423 = vadd.f32 %v359, 0.5
        %v424 = vadd.f32 %v360, 0.5
        %v425 = vadd.f32 %v361, 0.5
        %v426 = vadd.f32 %v362, 0.5
        %v427 = vadd.f32 %v363, 0.5
        %v428 = vadd.f32 %v364, 0.5
        %v429 = vadd.f32 %v365, 0.5
        %v430 = vadd.f32 %v366, 0.5
        %v431 = vadd.f32 %v367, 0.5
        %v432 = vadd.f32 %v368, 0.5
        %v433 = vadd.f32 %v369, 0.5
        %v434 = vadd.f32 %v370, 0.5
        %v435 = vadd.f32 %v371, 0.5
        %v436 = vadd.f32 %v372, 0.5
        %v437 = vadd.f32 %v373, 0.5
        %v438 = vadd.f32 %v374, 0.5
        %v439 = vadd.f32 %v375, 0.5
        %v440 = vadd.f32 %v376, 0.5
        %v441 = vadd.f32 %v377, 0.5
        %v442 = vadd.f32 %v378, 0.5
        %v443 = vadd.f32 %v379, 0.5
        %v444 = vadd.f32 %v380, 0.5
        %v445 = vadd.f32 %v381, 0.5
        %v446 = vadd.f32 %v382, 0.5
        %v447 = vadd.f32 %v383, 0.5
        %v448 = vadd.f32 %v384, 0.5
        %v449 = vadd.f32 %v385, 0.5
        %v450 = vadd.f32 %v386, 0.5
        %v451 = vadd.f32 %v387, 0.5
        %v452 = vadd.f32 %v388, 0.5
        %v453 = vadd.f32 %v389, 0.5
        %v454 = vadd.f32 %v390, 0.5
        %v455 = vadd.f32 %v391, 0.5
        %v456 = vadd.f32 %v392, 0.5
        %v457 = vadd.f32 %v393, 0.5
        %v458 = vmul.f32 %v138, %v394
        %v459 = vmul.f32 %v139, %v395
        %v460 = vmul.f32 %v140, %v396
        %v461 = vmul.f32 %v141, %v397
        %v462 = vmul.f32 %v142, %v398
        %v463 = vmul.f32 %v143, %v399
        %v464 = vmul.f32 %v144, %v400
        %v465 = vmul.f32 %v145, %v401
        %v466 = vmul.f32 %v146, %v402
        %v467 = vmul.f32 %v147, %v403
        %v468 = vmul.f32 %v148, %v404
        %v469 = vmul.f32 %v149, %v405
        %v470 = vmul.f32 %v150, %v406
        %v471 = vmul.f32 %v151, %v407
        %v472 = vmul.f32 %v152, %v408
        %v473 = vmul.f32 %v153, %v409
        %v474 = vmul.f32 %v154, %v410
        %v475 = vmul.f32 %v155, %v411
        %v476 = vmul.f32 %v156, %v412
        %v477 = vmul.f32 %v157, %v413
        %v478 = vmul.f32 %v158, %v414
        %v479 = vmul.f32 %v159, %v415
        %v480 = vmul.f32 %v160, %v416
        %v481 = vmul.f32 %v161, %v417
        %v482 = vmul.f32 %v162, %v418
        %v483 = vmul.f32 %v163, %v419
        %v484 = vmul.f32 %v164, %v420
        %v485 = vmul.f32 %v165, %v421
        %v486 = vmul.f32 %v166, %v422
        %v487 = vmul.f32 %v167, %v423
        %v488 = vmul.f32 %v168, %v424
        %v489 = vmul.f32 %v169, %v425
        %v490 = vmul.f32 %v170, %v426
        %v491 = vmul.f32 %v171, %v427
        %v492 = vmul.f32 %v172, %v428
        %v493 = vmul.f32 %v173, %v429
        %v494 = vmul.f32 %v174, %v430
        %v495 = vmul.f32 %v175, %v431
        %v496 = vmul.f32 %v176, %v432
        %v497 = vmul.f32 %v177, %v433
        %v498 = vmul.f32 %v178, %v434
        %v499 = vmul.f32 %v179, %v435
        %v500 = vmul.f32 %v180, %v436
        %v501 = vmul.f32 %v181, %v437
        %v502 = vmul.f32 %v182, %v438
        %v503 = vmul.f32 %v183, %v439
        %v504 = vmul.f32 %v184, %v440
        %v505 = vmul.f32 %v185, %v441
        %v506 = vmul.f32 %v186, %v442
        %v507 = vmul.f32 %v187, %v443
        %v508 = vmul.f32 %v188, %v444
        %v509 = vmul.f32 %v189, %v445
        %v510 = vmul.f32 %v190, %v446
        %v511 = vmul.f32 %v191, %v447
        %v512 = vmul.f32 %v192, %v448
        %v513 = vmul.f32 %v193, %v449
        %v514 = vmul.f32 %v194, %v450
        %v515 = vmul.f32 %v195, %v451
        %v516 = vmul.f32 %v196, %v452
        %v517 = vmul.f32 %v197, %v453
        %v518 = vmul.f32 %v198, %v454
        %v519 = vmul.f32 %v199, %v455
        %v520 = vmul.f32 %v200, %v456
        %v521 = vmul.f32 %v201, %v457
        %522 = vst [vmem:[%s135] sm:$0xff] %v458
        %523 = vst [vmem:[%s135 + $0x8] sm:$0xff] %v459
        %524 = vst [vmem:[%s135 + $0x10] sm:$0xff] %v460
        %525 = vst [vmem:[%s135 + $0x18] sm:$0xff] %v461
        %526 = vst [vmem:[%s135 + $0x20] sm:$0xff] %v462
        %527 = vst [vmem:[%s135 + $0x28] sm:$0xff] %v463
        %528 = vst [vmem:[%s135 + $0x30] sm:$0xff] %v464
        %529 = vst [vmem:[%s135 + $0x38] sm:$0xff] %v465
        %530 = vst [vmem:[%s135 + $0x40] sm:$0xff] %v466
        %531 = vst [vmem:[%s135 + $0x48] sm:$0xff] %v467
        %532 = vst [vmem:[%s135 + $0x50] sm:$0xff] %v468
        %533 = vst [vmem:[%s135 + $0x58] sm:$0xff] %v469
        %534 = vst [vmem:[%s135 + $0x60] sm:$0xff] %v470
        %535 = vst [vmem:[%s135 + $0x68] sm:$0xff] %v471
        %536 = vst [vmem:[%s135 + $0x70] sm:$0xff] %v472
        %537 = vst [vmem:[%s135 + $0x78] sm:$0xff] %v473
        %538 = vst [vmem:[%s135 + $0x80] sm:$0xff] %v474
        %539 = vst [vmem:[%s135 + $0x88] sm:$0xff] %v475
        %540 = vst [vmem:[%s135 + $0x90] sm:$0xff] %v476
        %541 = vst [vmem:[%s135 + $0x98] sm:$0xff] %v477
        %542 = vst [vmem:[%s135 + $0xa0] sm:$0xff] %v478
        %543 = vst [vmem:[%s135 + $0xa8] sm:$0xff] %v479
        %544 = vst [vmem:[%s135 + $0xb0] sm:$0xff] %v480
        %545 = vst [vmem:[%s135 + $0xb8] sm:$0xff] %v481
        %546 = vst [vmem:[%s135 + $0xc0] sm:$0xff] %v482
        %547 = vst [vmem:[%s135 + $0xc8] sm:$0xff] %v483
        %548 = vst [vmem:[%s135 + $0xd0] sm:$0xff] %v484
        %549 = vst [vmem:[%s135 + $0xd8] sm:$0xff] %v485
        %550 = vst [vmem:[%s135 + $0xe0] sm:$0xff] %v486
        %551 = vst [vmem:[%s135 + $0xe8] sm:$0xff] %v487
        %552 = vst [vmem:[%s135 + $0xf0] sm:$0xff] %v488
        %553 = vst [vmem:[%s135 + $0xf8] sm:$0xff] %v489
        %554 = vst [vmem:[%s135 + $0x100] sm:$0xff] %v490
        %555 = vst [vmem:[%s135 + $0x108] sm:$0xff] %v491
        %556 = vst [vmem:[%s135 + $0x110] sm:$0xff] %v492
        %557 = vst [vmem:[%s135 + $0x118] sm:$0xff] %v493
        %558 = vst [vmem:[%s135 + $0x120] sm:$0xff] %v494
        %559 = vst [vmem:[%s135 + $0x128] sm:$0xff] %v495
        %560 = vst [vmem:[%s135 + $0x130] sm:$0xff] %v496
        %561 = vst [vmem:[%s135 + $0x138] sm:$0xff] %v497
        %562 = vst [vmem:[%s135 + $0x140] sm:$0xff] %v498
        %563 = vst [vmem:[%s135 + $0x148] sm:$0xff] %v499
        %564 = vst [vmem:[%s135 + $0x150] sm:$0xff] %v500
        %565 = vst [vmem:[%s135 + $0x158] sm:$0xff] %v501
        %566 = vst [vmem:[%s135 + $0x160] sm:$0xff] %v502
        %567 = vst [vmem:[%s135 + $0x168] sm:$0xff] %v503
        %568 = vst [vmem:[%s135 + $0x170] sm:$0xff] %v504
        %569 = vst [vmem:[%s135 + $0x178] sm:$0xff] %v505
        %570 = vst [vmem:[%s135 + $0x180] sm:$0xff] %v506
        %571 = vst [vmem:[%s135 + $0x188] sm:$0xff] %v507
        %572 = vst [vmem:[%s135 + $0x190] sm:$0xff] %v508
        %573 = vst [vmem:[%s135 + $0x198] sm:$0xff] %v509
        %574 = vst [vmem:[%s135 + $0x1a0] sm:$0xff] %v510
        %575 = vst [vmem:[%s135 + $0x1a8] sm:$0xff] %v511
        %576 = vst [vmem:[%s135 + $0x1b0] sm:$0xff] %v512
        %577 = vst [vmem:[%s135 + $0x1b8] sm:$0xff] %v513
        %578 = vst [vmem:[%s135 + $0x1c0] sm:$0xff] %v514
        %579 = vst [vmem:[%s135 + $0x1c8] sm:$0xff] %v515
        %580 = vst [vmem:[%s135 + $0x1d0] sm:$0xff] %v516
        %581 = vst [vmem:[%s135 + $0x1d8] sm:$0xff] %v517
        %582 = vst [vmem:[%s135 + $0x1e0] sm:$0xff] %v518
        %583 = vst [vmem:[%s135 + $0x1e8] sm:$0xff] %v519
        %584 = vst [vmem:[%s135 + $0x1f0] sm:$0xff] %v520
        %585 = vst [vmem:[%s135 + $0x1f8] sm:$0xff] %v521
        %s586 = sand.u32 %s52, 1
        %s587 = scalar_lea.sflag [#allocation4], %s586
        %s588 = sand.u32 %s52, 1
        %s589 = smul.addr %s588, 512
        %s590 = scalar_lea.vmem [#allocation5], %s589
        // Predicated region
        $region29: #{tpu_custom_call.1} parent=23 // pred_check
          %p591 = pneg %p62
        $region30: #{tpu_custom_call.1} parent=23 // pred_check_branch
          %593 = sbr.rel (%p591) target = $region32
        $region31: #{tpu_custom_call.1} parent=23 // pred_region
          %s594 = smul.u32 4, %s18
          %s596 = ssub.s32 8192, 8192
          %597 = vsyncadd %s587, %s596
          %s598 = smul.addr %s594, 16
          %s599 = smul.addr %s598, 128
          %s600 = scalar_lea.hbm %s1, %s599
          %s601 = sshll.u32 %s590, 4
          %s602 = int_to_ptr.vmem [resolvable:$true] %s601
          %607 = dma.vmem_to_hbm [thread:$0]  %s602, 8192, %s600, %s587, 2048, 2048, 128
        $region32: #{tpu_custom_call.1} parent=23 // pred_fallthru
          _
      $region24: #{tpu_custom_call.1} parent=5 // pred_fallthru
        _
      %p608 = scmp.le.s32.totalorder 2, %s13
      // Predicated region
      $region33: #{tpu_custom_call.1} parent=5 // pred_check
        %p609 = pneg %p608
      $region34: #{tpu_custom_call.1} parent=5 // pred_check_branch
        %611 = sbr.rel (%p609) target = $region36
      $region35: #{tpu_custom_call.1} parent=5 // pred_region
        %s612 = ssub.s32 %s13, 2
        // Predicated region
        $region37: #{tpu_custom_call.1} parent=35 // pred_check
          %p613 = pneg %p68
        $region38: #{tpu_custom_call.1} parent=35 // pred_check_branch
          %615 = sbr.rel (%p613) target = $region40
        $region39: #{tpu_custom_call.1} parent=35 // pred_region
          %s616 = sand.u32 %s53, 1
          %s617 = scalar_lea.sflag [#allocation4], %s616
          %s618 = sand.u32 %s53, 1
          %s619 = smul.addr %s618, 512
          %s620 = scalar_lea.vmem [#allocation5], %s619
          %621 = dma.done %s617, 8192
        $region40: #{tpu_custom_call.1} parent=35 // pred_fallthru
          _
      $region36: #{tpu_custom_call.1} parent=5 // pred_fallthru
        _
    $region6: #{tpu_custom_call.1} parent=1 // loop_footer
      %s17 = sadd.s32 1, %s13
    $region7: #{tpu_custom_call.1} parent=1 // loop_footer_branch
      %12 = sbr.rel target = $region3
    $region8: #{tpu_custom_call.1} parent=1 // loop_exit
      _
    %622 = vsyncpa [#allocation3], 1
    %s623 = scalar_lea.sflag [#allocation3], 1
    %624 = vsyncpa %s623, 1
    %625 = vsyncpa [#allocation4], 1
    %s626 = scalar_lea.sflag [#allocation4], 1
    %627 = vsyncpa %s626, 1

</llo_original>
